<compile_context>
chip_gen: v5e
topology: v5e:2x2
jax: 0.10.0
libtpu: 0.0.40
codegen_flags: <defaults>
</compile_context>

<pallas_src>
import numpy as np
import jax
import jax.numpy as jnp
from jax.experimental import pallas as pl
from jax.experimental.pallas import tpu as pltpu


def _round_up(x, m):
    return (x + m - 1) // m * m


# ------------------------------ Pallas kernel --------------------------------
def _fused_entity_mlp_kernel(gid_ref, t1_ref, b1_ref, wp_ref, bp_ref, o_ref):
    # gid_ref: [TB, C]        offset-shifted embedding row ids (int32)
    # t1_ref : [R_pad, H_pad] stacked (categorical + sbert) tables pre-folded
    #                         through the first Linear layer, bf16
    # b1_ref : [1, H_pad]     f32
    # wp_ref : [H_pad, O_pad] predict Linear weight ([in, out] vs torch [out, in]), bf16
    # bp_ref : [1, O_pad]     f32
    # o_ref  : [TB, O_pad]    f32 sigmoid outputs (lane-dense)
    tb, n_cols = gid_ref.shape
    r_pad = t1_ref.shape[0]

    gid = gid_ref[...]
    r_iota = jax.lax.broadcasted_iota(jnp.int32, (tb, r_pad), 1)
    multi_hot = jnp.zeros((tb, r_pad), dtype=jnp.float32)
    for c in range(n_cols):  # static (4 columns): VPU compares only, no gather op
        multi_hot = multi_hot + (gid[:, c:c + 1] == r_iota).astype(jnp.float32)

    # gather + concat + first Linear == one MXU matmul against the folded,
    # VMEM-resident table (disjoint row-offset ranges => no collisions).
    h = jnp.dot(multi_hot.astype(jnp.bfloat16), t1_ref[...],
                preferred_element_type=jnp.float32) + b1_ref[...]   # [TB, H_pad]
    h = jnp.maximum(h, 0.0)                                          # ReLU (f32)
    # TODO(synk): nn.Dropout(p=0.4) is identity in eval mode; training-mode
    # dropout is not implemented in this kernel.

    y = jnp.dot(h.astype(jnp.bfloat16), wp_ref[...],
                preferred_element_type=jnp.float32) + bp_ref[...]    # [TB, O_pad]

    # sigmoid: exp on the EUP, divide via approx reciprocal (also EUP slot);
    # clamp guards the tiny approx overshoot so outputs stay in [0, 1].
    sig = pl.reciprocal(1.0 + jnp.exp(-y), approx=True)
    o_ref[...] = jnp.minimum(sig, 1.0)


def fused_entity_mlp(gid, t1, b1, wp, bp, *, max_batch_tile=256):
    """gid: [B, C] int32 offset-shifted row ids. Returns [B_pad, O_pad] f32."""
    B, C = gid.shape
    R_pad, H_pad = t1.shape
    O_pad = wp.shape[1]

    # Batch tile: up to 256 rows (tiny per-step VMEM; safe on v7x's 64 MiB
    # VMEM budget without raising vmem_limit_bytes).
    TB = min(max_batch_tile, _round_up(B, 8))
    B_pad = _round_up(B, TB)
    if B_pad != B:
        gid = jnp.pad(gid, ((0, B_pad - B), (0, 0)))  # pad rows hit row 0 (valid)

    resident = lambda shape: pl.BlockSpec(shape, lambda i: (0, 0))

    flops = 2 * B_pad * (R_pad * H_pad + H_pad * O_pad) + B_pad * R_pad * C
    bytes_accessed = (4 * B_pad * C
                      + 2 * (R_pad * H_pad + H_pad * O_pad)
                      + 4 * (H_pad + O_pad)
                      + 4 * B_pad * O_pad)

    return pl.pallas_call(
        _fused_entity_mlp_kernel,
        out_shape=jax.ShapeDtypeStruct((B_pad, O_pad), jnp.float32),
        grid=(B_pad // TB,),
        in_specs=[
            pl.BlockSpec((TB, C), lambda i: (i, 0)),   # streamed per batch tile
            resident((R_pad, H_pad)),                  # folded table stays in VMEM
            resident((1, H_pad)),
            resident((H_pad, O_pad)),
            resident((1, O_pad)),
        ],
        out_specs=pl.BlockSpec((TB, O_pad), lambda i: (i, 0)),  # lane-dense stores
        compiler_params=pltpu.CompilerParams(
            dimension_semantics=("parallel",)),        # megacore splits the batch
        cost_estimate=pl.CostEstimate(
            flops=flops,
            transcendentals=2 * B_pad * O_pad,
            bytes_accessed=bytes_accessed),
    )(gid, t1, b1, wp, bp)


# ---------------------------- Model (params + glue) ---------------------------
class EntityCatSbertJAX:
    """JAX/Pallas port of EntityCat_sbert (eval-mode forward)."""

    LANE = 128

    def __init__(self, embedding_size, output_size, word_weight, encode_array,
                 neurons_in_layers=(100,), p=0.4, key=jax.random.PRNGKey(0)):
        self.embedding_size = [tuple(e) for e in embedding_size]
        self.embedding_size_len = len(self.embedding_size)
        self.output_size = int(output_size)
        del p  # dropout prob: identity in eval mode

        self.encode_array = jnp.asarray(encode_array, dtype=jnp.int32)
        self.sorter = jnp.argsort(self.encode_array)
        self.sorted_encode = self.encode_array[self.sorter]

        self.word_weight = jnp.asarray(word_weight, dtype=jnp.float32)  # frozen sbert
        sbert_dim = self.word_weight.shape[1]

        # TODO(synk): only a single hidden layer is fused into the kernel; deeper
        # neurons_in_layers stacks would chain additional resident weight blocks.
        assert len(neurons_in_layers) == 1
        hidden = int(neurons_in_layers[0])

        keys = jax.random.split(key, self.embedding_size_len + 2)
        ki = 0

        # categorical embedding tables: N(0, 0.01)
        self.emb_tables = []
        for (ni, nf) in self.embedding_size:
            self.emb_tables.append(
                0.01 * jax.random.normal(keys[ki], (ni, nf), dtype=jnp.float32))
            ki += 1

        num_categorical = sum(nf for _, nf in self.embedding_size)
        self.feat_dim = num_categorical + sbert_dim

        # hidden Linear (xavier_normal weight, zero bias), stored as [in, out]
        std1 = np.sqrt(2.0 / (self.feat_dim + hidden))
        self.w1 = std1 * jax.random.normal(keys[ki], (self.feat_dim, hidden),
                                           dtype=jnp.float32)
        ki += 1
        self.b1 = jnp.zeros((hidden,), dtype=jnp.float32)

        # predict Linear (kaiming_normal a=1 -> std = 1/sqrt(fan_in)), zero bias
        stdp = 1.0 / np.sqrt(hidden)
        self.wp = stdp * jax.random.normal(keys[ki], (hidden, self.output_size),
                                           dtype=jnp.float32)
        self.bp = jnp.zeros((self.output_size,), dtype=jnp.float32)

        self._build_padded_params(hidden)

    def _build_padded_params(self, hidden):
        LANE = self.LANE
        # Stack all tables (3 categorical + frozen sbert) into one row-offset
        # table whose columns sit at the concat feature offsets.
        tables = ([np.asarray(t, dtype=np.float32) for t in self.emb_tables]
                  + [np.asarray(self.word_weight, dtype=np.float32)])
        row_sizes = [t.shape[0] for t in tables]
        col_sizes = [t.shape[1] for t in tables]
        R = sum(row_sizes)
        # TODO(synk): multi-hot gather scales O(R) per row; for very large item
        # vocabularies switch to a manual-DMA row gather instead.
        R_pad = _round_up(R, 128)              # lane-dense multi-hot / MXU K dim
        big = np.zeros((R_pad, self.feat_dim), dtype=np.float32)
        row_off, col_off, offsets = 0, 0, []
        for t, nr, nc in zip(tables, row_sizes, col_sizes):
            big[row_off:row_off + nr, col_off:col_off + nc] = t
            offsets.append(row_off)
            row_off += nr
            col_off += nc
        self.row_offsets = jnp.asarray(offsets, dtype=jnp.int32)     # [C + 1]

        H_pad = _round_up(hidden, LANE)
        O_pad = _round_up(self.output_size, LANE)

        # Fold the stacked table through the first Linear layer (exact: concat
        # segments occupy disjoint feature columns, so
        # concat(emb rows) @ W1 == sum over selected rows of (table @ W1)).
        t1 = big @ np.asarray(self.w1, dtype=np.float32)             # f32 fold
        t1p = np.zeros((R_pad, H_pad), dtype=np.float32)
        t1p[:, :hidden] = t1
        self.t1_pad = jnp.asarray(t1p, dtype=jnp.bfloat16)

        wpp = np.zeros((H_pad, O_pad), dtype=np.float32)
        wpp[:hidden, :self.output_size] = np.asarray(self.wp)
        self.wp_pad = jnp.asarray(wpp, dtype=jnp.bfloat16)

        b1p = np.zeros((1, H_pad), dtype=np.float32)
        b1p[0, :hidden] = np.asarray(self.b1)
        bpp = np.zeros((1, O_pad), dtype=np.float32)
        bpp[0, :self.output_size] = np.asarray(self.bp)
        self.b1_pad = jnp.asarray(b1p)
        self.bp_pad = jnp.asarray(bpp)

    def _item_index(self, x_categorical):
        itemids = x_categorical[:, 1]
        pos = jnp.searchsorted(self.sorted_encode, itemids)
        pos = jnp.clip(pos, 0, self.sorter.shape[0] - 1)  # guard unseen item ids
        return self.sorter[pos]

    def __call__(self, x_categorical):
        assert self.embedding_size_len == x_categorical.shape[1], \
            'The number of features in the feature list and x_categorical shape should match'
        x_categorical = x_categorical.astype(jnp.int32)
        item_index = self._item_index(x_categorical)
        ids = jnp.concatenate([x_categorical, item_index[:, None]], axis=1)
        gid = ids + self.row_offsets[None, :]          # global rows in folded table

        B = x_categorical.shape[0]
        out = fused_entity_mlp(gid, self.t1_pad, self.b1_pad,
                               self.wp_pad, self.bp_pad)
        return out[:B, :self.output_size]


# ------------------------------------ Demo ------------------------------------
if __name__ == "__main__":
    key = jax.random.PRNGKey(0)
    k_ww, k_perm, k_cat0, k_cat1, k_cat2, k_model = jax.random.split(key, 6)

    B = 8
    embedding_size = [(10, 8), (12, 8), (9, 8)]   # column 1 is the item-id column
    num_items = embedding_size[1][0]              # 12
    sbert_dim = 32
    output_size = 8
    neurons_in_layers = (64,)

    # frozen sbert table and encoder array (a permutation of item ids)
    word_weight = jax.random.normal(k_ww, (num_items, sbert_dim), dtype=jnp.float32)
    encode_array = jax.random.permutation(k_perm, jnp.arange(num_items, dtype=jnp.int32))

    # categorical input [B, 3]
    c0 = jax.random.randint(k_cat0, (B, 1), 0, embedding_size[0][0])
    c1 = jax.random.randint(k_cat1, (B, 1), 0, embedding_size[1][0])
    c2 = jax.random.randint(k_cat2, (B, 1), 0, embedding_size[2][0])
    x_categorical = jnp.concatenate([c0, c1, c2], axis=1).astype(jnp.int32)

    model = EntityCatSbertJAX(embedding_size, output_size, word_weight,
                              encode_array, neurons_in_layers, key=k_model)

    out = jax.block_until_ready(model(x_categorical))
    assert out.shape == (B, output_size)
    assert bool(jnp.all((out >= 0.0) & (out <= 1.0)))

    # Pure-JAX f32 reference of the same forward pass (bf16 kernel -> loose tol).
    to_cat = [tbl[x_categorical[:, c]] for c, tbl in enumerate(model.emb_tables)]
    pos = jnp.searchsorted(model.sorted_encode, x_categorical[:, 1])
    item_index = model.sorter[jnp.clip(pos, 0, model.sorter.shape[0] - 1)]
    to_cat.append(model.word_weight[item_index])
    x_ref = jnp.concatenate(to_cat, axis=1)
    h_ref = jnp.maximum(x_ref @ model.w1 + model.b1, 0.0)
    y_ref = h_ref @ model.wp + model.bp
    ref = jax.nn.sigmoid(y_ref)
    err = float(jnp.max(jnp.abs(out - ref)))
    assert err < 5e-2, f"max abs error vs reference: {err}"

    print("KERNEL_OK")
</pallas_src>

<mosaic_0001>
module attributes {stable_mosaic.version = 11 : i64} {
  func.func @_fused_entity_mlp_kernel(%arg0: i32, %arg1: memref<8x4xi32, #tpu.memory_space<vmem>>, %arg2: memref<128x128xbf16, #tpu.memory_space<vmem>>, %arg3: memref<1x128xf32, #tpu.memory_space<vmem>>, %arg4: memref<128x128xbf16, #tpu.memory_space<vmem>>, %arg5: memref<1x128xf32, #tpu.memory_space<vmem>>, %arg6: memref<8x128xf32, #tpu.memory_space<vmem>>) attributes {dimension_semantics = [#tpu.dimension_semantics<parallel>], iteration_bounds = array<i64: 1>, scalar_prefetch = 0 : i64, scratch_operands = 0 : i64, tpu.core_type = #tpu.core_type<tc>, window_params = [{transform_indices = @transform_0, window_bounds = array<i64: 8, 4>}, {pipeline_mode = #tpu.pipeline_mode<synchronous>, transform_indices = @transform_1, window_bounds = array<i64: 128, 128>}, {pipeline_mode = #tpu.pipeline_mode<synchronous>, transform_indices = @transform_2, window_bounds = array<i64: 1, 128>}, {pipeline_mode = #tpu.pipeline_mode<synchronous>, transform_indices = @transform_3, window_bounds = array<i64: 128, 128>}, {pipeline_mode = #tpu.pipeline_mode<synchronous>, transform_indices = @transform_4, window_bounds = array<i64: 1, 128>}, {transform_indices = @transform_5, window_bounds = array<i64: 8, 128>}]} {
    %c0 = arith.constant 0 : index
    %c0_0 = arith.constant 0 : index
    %0 = vector.load %arg1[%c0, %c0_0] : memref<8x4xi32, #tpu.memory_space<vmem>>, vector<8x4xi32>
    %1 = tpu.iota {dimensions = array<i32: 1>} : vector<8x128xi32>
    %cst = arith.constant 0.000000e+00 : f32
    %2 = vector.broadcast %cst : f32 to vector<8x128xf32>
    %3 = vector.extract_strided_slice %0 {offsets = [0, 0], sizes = [8, 1], strides = [1, 1]} : vector<8x4xi32> to vector<8x1xi32>
    %4 = vector.broadcast %3 : vector<8x1xi32> to vector<8x128xi32>
    %5 = arith.cmpi eq, %4, %1 : vector<8x128xi32>
    %6 = arith.extui %5 : vector<8x128xi1> to vector<8x128xi32>
    %7 = arith.sitofp %6 : vector<8x128xi32> to vector<8x128xf32>
    %8 = arith.addf %2, %7 : vector<8x128xf32>
    %9 = vector.extract_strided_slice %0 {offsets = [0, 1], sizes = [8, 1], strides = [1, 1]} : vector<8x4xi32> to vector<8x1xi32>
    %10 = vector.broadcast %9 : vector<8x1xi32> to vector<8x128xi32>
    %11 = arith.cmpi eq, %10, %1 : vector<8x128xi32>
    %12 = arith.extui %11 : vector<8x128xi1> to vector<8x128xi32>
    %13 = arith.sitofp %12 : vector<8x128xi32> to vector<8x128xf32>
    %14 = arith.addf %8, %13 : vector<8x128xf32>
    %15 = vector.extract_strided_slice %0 {offsets = [0, 2], sizes = [8, 1], strides = [1, 1]} : vector<8x4xi32> to vector<8x1xi32>
    %16 = vector.broadcast %15 : vector<8x1xi32> to vector<8x128xi32>
    %17 = arith.cmpi eq, %16, %1 : vector<8x128xi32>
    %18 = arith.extui %17 : vector<8x128xi1> to vector<8x128xi32>
    %19 = arith.sitofp %18 : vector<8x128xi32> to vector<8x128xf32>
    %20 = arith.addf %14, %19 : vector<8x128xf32>
    %21 = vector.extract_strided_slice %0 {offsets = [0, 3], sizes = [8, 1], strides = [1, 1]} : vector<8x4xi32> to vector<8x1xi32>
    %22 = vector.broadcast %21 : vector<8x1xi32> to vector<8x128xi32>
    %23 = arith.cmpi eq, %22, %1 : vector<8x128xi32>
    %24 = arith.extui %23 : vector<8x128xi1> to vector<8x128xi32>
    %25 = arith.sitofp %24 : vector<8x128xi32> to vector<8x128xf32>
    %26 = arith.addf %20, %25 : vector<8x128xf32>
    %27 = arith.truncf %26 : vector<8x128xf32> to vector<8x128xbf16>
    %c0_1 = arith.constant 0 : index
    %c0_2 = arith.constant 0 : index
    %28 = vector.load %arg2[%c0_1, %c0_2] : memref<128x128xbf16, #tpu.memory_space<vmem>>, vector<128x128xbf16>
    %cst_3 = arith.constant dense<0.000000e+00> : vector<8x128xf32>
    %29 = tpu.matmul %27, %28, %cst_3 {dimension_numbers = #tpu.dot_dimension_numbers<[1], [0], [0], [1], [0, 0, 1, 1], [], []>} : vector<8x128xbf16>, vector<128x128xbf16>, vector<8x128xf32> -> vector<8x128xf32>
    %c0_4 = arith.constant 0 : index
    %c0_5 = arith.constant 0 : index
    %30 = vector.load %arg3[%c0_4, %c0_5] : memref<1x128xf32, #tpu.memory_space<vmem>>, vector<1x128xf32>
    %31 = vector.broadcast %30 : vector<1x128xf32> to vector<8x128xf32>
    %32 = arith.addf %29, %31 : vector<8x128xf32>
    %cst_6 = arith.constant 0.000000e+00 : f32
    %33 = vector.broadcast %cst_6 : f32 to vector<8x128xf32>
    %34 = arith.maximumf %32, %33 : vector<8x128xf32>
    %35 = arith.truncf %34 : vector<8x128xf32> to vector<8x128xbf16>
    %c0_7 = arith.constant 0 : index
    %c0_8 = arith.constant 0 : index
    %36 = vector.load %arg4[%c0_7, %c0_8] : memref<128x128xbf16, #tpu.memory_space<vmem>>, vector<128x128xbf16>
    %cst_9 = arith.constant dense<0.000000e+00> : vector<8x128xf32>
    %37 = tpu.matmul %35, %36, %cst_9 {dimension_numbers = #tpu.dot_dimension_numbers<[1], [0], [0], [1], [0, 0, 1, 1], [], []>} : vector<8x128xbf16>, vector<128x128xbf16>, vector<8x128xf32> -> vector<8x128xf32>
    %c0_10 = arith.constant 0 : index
    %c0_11 = arith.constant 0 : index
    %38 = vector.load %arg5[%c0_10, %c0_11] : memref<1x128xf32, #tpu.memory_space<vmem>>, vector<1x128xf32>
    %39 = vector.broadcast %38 : vector<1x128xf32> to vector<8x128xf32>
    %40 = arith.addf %37, %39 : vector<8x128xf32>
    %cst_12 = arith.constant 0.000000e+00 : f32
    %41 = vector.broadcast %cst_12 : f32 to vector<8x128xf32>
    %42 = arith.subf %41, %40 : vector<8x128xf32>
    %43 = math.exp %42 : vector<8x128xf32>
    %cst_13 = arith.constant 1.000000e+00 : f32
    %44 = vector.broadcast %cst_13 : f32 to vector<8x128xf32>
    %45 = arith.addf %44, %43 : vector<8x128xf32>
    %46 = tpu.reciprocal %45 {approx = true} : vector<8x128xf32> -> vector<8x128xf32>
    %cst_14 = arith.constant 1.000000e+00 : f32
    %47 = vector.broadcast %cst_14 : f32 to vector<8x128xf32>
    %48 = arith.minimumf %46, %47 : vector<8x128xf32>
    %c0_15 = arith.constant 0 : index
    %c0_16 = arith.constant 0 : index
    %49 = vector.load %arg6[%c0_15, %c0_16] : memref<8x128xf32, #tpu.memory_space<vmem>>, vector<8x128xf32>
    tpu.vector_store %arg6[%c0_15, %c0_16], %48 {strides = array<i32>} : memref<8x128xf32, #tpu.memory_space<vmem>>, vector<8x128xf32>,
    return
  }
  func.func @transform_0(%arg0: i32) -> (i32, i32) {
    %c0_i32 = arith.constant 0 : i32
    %c0_i32_0 = arith.constant 0 : i32
    return %arg0, %c0_i32 : i32, i32
  }
  func.func @transform_1(%arg0: i32) -> (i32, i32) {
    %c0_i32 = arith.constant 0 : i32
    %c0_i32_0 = arith.constant 0 : i32
    %c0_i32_1 = arith.constant 0 : i32
    return %c0_i32, %c0_i32_0 : i32, i32
  }
  func.func @transform_2(%arg0: i32) -> (i32, i32) {
    %c0_i32 = arith.constant 0 : i32
    %c0_i32_0 = arith.constant 0 : i32
    %c0_i32_1 = arith.constant 0 : i32
    return %c0_i32, %c0_i32_0 : i32, i32
  }
  func.func @transform_3(%arg0: i32) -> (i32, i32) {
    %c0_i32 = arith.constant 0 : i32
    %c0_i32_0 = arith.constant 0 : i32
    %c0_i32_1 = arith.constant 0 : i32
    return %c0_i32, %c0_i32_0 : i32, i32
  }
  func.func @transform_4(%arg0: i32) -> (i32, i32) {
    %c0_i32 = arith.constant 0 : i32
    %c0_i32_0 = arith.constant 0 : i32
    %c0_i32_1 = arith.constant 0 : i32
    return %c0_i32, %c0_i32_0 : i32, i32
  }
  func.func @transform_5(%arg0: i32) -> (i32, i32) {
    %c0_i32 = arith.constant 0 : i32
    %c0_i32_0 = arith.constant 0 : i32
    return %arg0, %c0_i32 : i32, i32
  }
}

</mosaic_0001>

<llo_original>
// kernel: tpu_custom_call.1
$region0: #{tpu_custom_call.1}
  #allocation0 [shape = 'u32[]', space=smem, size = 0x4, offset = 0x4, fixed_abs, tag = 'smem constant byte address 0x4 - core index']
  #allocation1 [shape = 'u32[72,128]{1,0:T(1,128)}', space=vmem, size = 0x9000, scoped, tag = 'internal scratch']
  %s0 = inlined_call_operand.vmem [shape: s32[8,4], index: 0, kind: input, shape index: {}]
  %s1 = inlined_call_operand.hbm [shape: bf16[128,128], index: 1, kind: input, shape index: {}]
  %s2 = inlined_call_operand.vmem [shape: f32[1,128], index: 2, kind: input, shape index: {}]
  %s3 = inlined_call_operand.hbm [shape: bf16[128,128], index: 3, kind: input, shape index: {}]
  %s4 = inlined_call_operand.vmem [shape: f32[1,128], index: 4, kind: input, shape index: {}]
  %s5 = inlined_call_operand.hbm [shape: f32[8,128], index: 5, kind: output, shape index: {}]
  %s6 = sld [smem:[#allocation0]]
  $region38: #{tpu_custom_call.1} parent=0
    _
  %s8 = ssub.s32 1, %s6
  %s9 = scalar_select 0, %s8, %s6
  $region1: #{tpu_custom_call.1} parent=0
    #allocation2 [shape = 'u8[32768]{0}', space=vmem, size = 0x8000, scoped, tag = 'input window, operand 1, single buffered']
    #allocation3 [shape = 's32[1]{0}', space=sflag, size = 0x4, scoped, tag = 'scoped memory for tpu_custom_call.1']
    #allocation4 [shape = 's32[1]{0}', space=sflag, size = 0x4, scoped, tag = 'scoped memory for tpu_custom_call.1']
    #allocation5 [shape = 'u8[32768]{0}', space=vmem, size = 0x8000, scoped, tag = 'input window, operand 3, single buffered']
    #allocation6 [shape = 's32[1]{0}', space=sflag, size = 0x4, scoped, tag = 'scoped memory for tpu_custom_call.1']
    #allocation7 [shape = 'u8[4096]{0}', space=vmem, size = 0x1000, scoped, tag = 'output window, operand 0, single buffered']
    %10 = vsyncpa [#allocation3], 0
    %11 = vsyncpa [#allocation6], 0
    %12 = vsyncpa [#allocation4], 0
    // Predicated region
    $region2: #{tpu_custom_call.1} parent=1 // pred_check
      _
    $region3: #{tpu_custom_call.1} parent=1 // pred_check_branch
      %14 = sbr.rel (0) target = $region5
    $region4: #{tpu_custom_call.1} parent=1 // pred_region
      _
    $region5: #{tpu_custom_call.1} parent=1 // pred_fallthru
      _
    // Predicated region
    $region6: #{tpu_custom_call.1} parent=1 // pred_check
      _
    $region7: #{tpu_custom_call.1} parent=1 // pred_check_branch
      %16 = sbr.rel (0) target = $region9
    $region8: #{tpu_custom_call.1} parent=1 // pred_region
      %18 = vsyncadd [#allocation3], 0
      %s19 = sshll.u32 %s1, 4
      %s20 = int_to_ptr.hbm [resolvable:$true] %s19
      %s21 = sshll.u32 [#allocation2], 4
      %s22 = int_to_ptr.vmem [resolvable:$true] %s21
      %27 = dma.hbm_to_vmem [thread:$0]  %s20, 1024, %s22, [#allocation3], 64, 64, 4
    $region9: #{tpu_custom_call.1} parent=1 // pred_fallthru
      _
    // Predicated region
    $region10: #{tpu_custom_call.1} parent=1 // pred_check
      _
    $region11: #{tpu_custom_call.1} parent=1 // pred_check_branch
      %29 = sbr.rel (0) target = $region13
    $region12: #{tpu_custom_call.1} parent=1 // pred_region
      _
    $region13: #{tpu_custom_call.1} parent=1 // pred_fallthru
      _
    // Predicated region
    $region14: #{tpu_custom_call.1} parent=1 // pred_check
      _
    $region15: #{tpu_custom_call.1} parent=1 // pred_check_branch
      %31 = sbr.rel (0) target = $region17
    $region16: #{tpu_custom_call.1} parent=1 // pred_region
      %33 = vsyncadd [#allocation6], 0
      %s34 = sshll.u32 %s3, 4
      %s35 = int_to_ptr.hbm [resolvable:$true] %s34
      %s36 = sshll.u32 [#allocation5], 4
      %s37 = int_to_ptr.vmem [resolvable:$true] %s36
      %42 = dma.hbm_to_vmem [thread:$0]  %s35, 1024, %s37, [#allocation6], 64, 64, 4
    $region17: #{tpu_custom_call.1} parent=1 // pred_fallthru
      _
    // Predicated region
    $region18: #{tpu_custom_call.1} parent=1 // pred_check
      _
    $region19: #{tpu_custom_call.1} parent=1 // pred_check_branch
      %44 = sbr.rel (0) target = $region21
    $region20: #{tpu_custom_call.1} parent=1 // pred_region
      _
    $region21: #{tpu_custom_call.1} parent=1 // pred_fallthru
      _
    // Predicated region
    $region22: #{tpu_custom_call.1} parent=1 // pred_check
      _
    $region23: #{tpu_custom_call.1} parent=1 // pred_check_branch
      %46 = sbr.rel (0) target = $region25
    $region24: #{tpu_custom_call.1} parent=1 // pred_region
      %48 = dma.done [#allocation3], 1024
    $region25: #{tpu_custom_call.1} parent=1 // pred_fallthru
      _
    // Predicated region
    $region26: #{tpu_custom_call.1} parent=1 // pred_check
      _
    $region27: #{tpu_custom_call.1} parent=1 // pred_check_branch
      %50 = sbr.rel (0) target = $region29
    $region28: #{tpu_custom_call.1} parent=1 // pred_region
      %52 = dma.done [#allocation6], 1024
    $region29: #{tpu_custom_call.1} parent=1 // pred_fallthru
      _
    %v53 = vld [vmem:[%s0] sm:$0xff]
    %v54 = vlaneseq
    %v55 = vand.u32 %v54, 127
    %56 = vset.pattern.permute.xlu0 0
    %57 = vperm.xlu0 %56, %v53
    %v58 = vpop.permute.xlu0 %57
    %vm59 = vcmp.eq.s32.totalorder %v58, %v55
    %v60 = vsel %vm59, 1, 0
    %v61 = vcvt.s32.f32 %v60
    %v62 = vadd.f32 %v61, 0.0
    %63 = vset.pattern.permute.xlu0 1
    %64 = vperm.xlu0 %63, %v53
    %v65 = vpop.permute.xlu0 %64
    %vm66 = vcmp.eq.s32.totalorder %v65, %v55
    %v67 = vsel %vm66, 1, 0
    %v68 = vcvt.s32.f32 %v67
    %v69 = vadd.f32 %v62, %v68
    %70 = vset.pattern.permute.xlu0 2
    %71 = vperm.xlu0 %70, %v53
    %v72 = vpop.permute.xlu0 %71
    %vm73 = vcmp.eq.s32.totalorder %v72, %v55
    %v74 = vsel %vm73, 1, 0
    %v75 = vcvt.s32.f32 %v74
    %v76 = vadd.f32 %v69, %v75
    %77 = vset.pattern.permute.xlu0 3
    %78 = vperm.xlu0 %77, %v53
    %v79 = vpop.permute.xlu0 %78
    %vm80 = vcmp.eq.s32.totalorder %v79, %v55
    %v81 = vsel %vm80, 1, 0
    %v82 = vcvt.s32.f32 %v81
    %v83 = vadd.f32 %v76, %v82
    %v84 = vpack.c.bf16 %v83, %v83
    %v85 = vld [vmem:[#allocation2] sm:$0xf]
    %v86 = vld [vmem:[#allocation2 + $0x4] sm:$0xf]
    %v87 = vld [vmem:[#allocation2 + $0x8] sm:$0xf]
    %v88 = vld [vmem:[#allocation2 + $0xc] sm:$0xf]
    %v89 = vld [vmem:[#allocation2 + $0x10] sm:$0xf]
    %v90 = vld [vmem:[#allocation2 + $0x14] sm:$0xf]
    %v91 = vld [vmem:[#allocation2 + $0x18] sm:$0xf]
    %v92 = vld [vmem:[#allocation2 + $0x1c] sm:$0xf]
    %v93 = vld [vmem:[#allocation2 + $0x20] sm:$0xf]
    %v94 = vld [vmem:[#allocation2 + $0x24] sm:$0xf]
    %v95 = vld [vmem:[#allocation2 + $0x28] sm:$0xf]
    %v96 = vld [vmem:[#allocation2 + $0x2c] sm:$0xf]
    %v97 = vld [vmem:[#allocation2 + $0x30] sm:$0xf]
    %v98 = vld [vmem:[#allocation2 + $0x34] sm:$0xf]
    %v99 = vld [vmem:[#allocation2 + $0x38] sm:$0xf]
    %v100 = vld [vmem:[#allocation2 + $0x3c] sm:$0xf]
    %v101 = vld [vmem:[%s2] sm:$0x1]
    %v103 = vperm.slane %v101, 0
    %v121 = vunpack.c.l.b16 %v85
    %v122 = vunpack.c.l.b16 %v86
    %v123 = vunpack.c.l.b16 %v87
    %v124 = vunpack.c.l.b16 %v88
    %v125 = vunpack.c.l.b16 %v89
    %v126 = vunpack.c.l.b16 %v90
    %v127 = vunpack.c.l.b16 %v91
    %v128 = vunpack.c.l.b16 %v92
    %v129 = vunpack.c.l.b16 %v93
    %v130 = vunpack.c.l.b16 %v94
    %v131 = vunpack.c.l.b16 %v95
    %v132 = vunpack.c.l.b16 %v96
    %v133 = vunpack.c.l.b16 %v97
    %v134 = vunpack.c.l.b16 %v98
    %v135 = vunpack.c.l.b16 %v99
    %v136 = vunpack.c.l.b16 %v100
    %v137 = vpack.c.b16 %v122, %v121
    %v138 = vpack.c.b16 %v124, %v123
    %v139 = vpack.c.b16 %v126, %v125
    %v140 = vpack.c.b16 %v128, %v127
    %v141 = vpack.c.b16 %v130, %v129
    %v142 = vpack.c.b16 %v132, %v131
    %v143 = vpack.c.b16 %v134, %v133
    %v144 = vpack.c.b16 %v136, %v135
    %153 = vmatpush.bf16.msra.mxu0 %v144
    %154 = vmatpush.bf16.msra.mxu0 %v143
    %155 = vmatpush.bf16.msra.mxu0 %v142
    %156 = vmatpush.bf16.msra.mxu0 %v141
    %157 = vmatpush.bf16.msra.mxu0 %v140
    %158 = vmatpush.bf16.msra.mxu0 %v139
    %159 = vmatpush.bf16.msra.mxu0 %v138
    %160 = vmatpush.bf16.msra.mxu0 %v137
    %161 = vmatmul.bf16.gmra.mxu0 %v84
    %v162 = vpop.f32.mrf.mxu0
    %v163 = vadd.f32 %v103, %v162
    %v164 = vpop.f32.mrf.mxu0
    %165 = vdwg.mxu0
    %v166 = vmax.f32 %v163, 0.0
    %v167 = vpack.c.bf16 %v166, %v166
    %v168 = vld [vmem:[#allocation5] sm:$0xf]
    %v169 = vld [vmem:[#allocation5 + $0x4] sm:$0xf]
    %v170 = vld [vmem:[#allocation5 + $0x8] sm:$0xf]
    %v171 = vld [vmem:[#allocation5 + $0xc] sm:$0xf]
    %v172 = vld [vmem:[#allocation5 + $0x10] sm:$0xf]
    %v173 = vld [vmem:[#allocation5 + $0x14] sm:$0xf]
    %v174 = vld [vmem:[#allocation5 + $0x18] sm:$0xf]
    %v175 = vld [vmem:[#allocation5 + $0x1c] sm:$0xf]
    %v176 = vld [vmem:[#allocation5 + $0x20] sm:$0xf]
    %v177 = vld [vmem:[#allocation5 + $0x24] sm:$0xf]
    %v178 = vld [vmem:[#allocation5 + $0x28] sm:$0xf]
    %v179 = vld [vmem:[#allocation5 + $0x2c] sm:$0xf]
    %v180 = vld [vmem:[#allocation5 + $0x30] sm:$0xf]
    %v181 = vld [vmem:[#allocation5 + $0x34] sm:$0xf]
    %v182 = vld [vmem:[#allocation5 + $0x38] sm:$0xf]
    %v183 = vld [vmem:[#allocation5 + $0x3c] sm:$0xf]
    %v184 = vld [vmem:[%s4] sm:$0x1]
    %v186 = vperm.slane %v184, 0
    %v204 = vunpack.c.l.b16 %v168
    %v205 = vunpack.c.l.b16 %v169
    %v206 = vunpack.c.l.b16 %v170
    %v207 = vunpack.c.l.b16 %v171
    %v208 = vunpack.c.l.b16 %v172
    %v209 = vunpack.c.l.b16 %v173
    %v210 = vunpack.c.l.b16 %v174
    %v211 = vunpack.c.l.b16 %v175
    %v212 = vunpack.c.l.b16 %v176
    %v213 = vunpack.c.l.b16 %v177
    %v214 = vunpack.c.l.b16 %v178
    %v215 = vunpack.c.l.b16 %v179
    %v216 = vunpack.c.l.b16 %v180
    %v217 = vunpack.c.l.b16 %v181
    %v218 = vunpack.c.l.b16 %v182
    %v219 = vunpack.c.l.b16 %v183
    %v220 = vpack.c.b16 %v205, %v204
    %v221 = vpack.c.b16 %v207, %v206
    %v222 = vpack.c.b16 %v209, %v208
    %v223 = vpack.c.b16 %v211, %v210
    %v224 = vpack.c.b16 %v213, %v212
    %v225 = vpack.c.b16 %v215, %v214
    %v226 = vpack.c.b16 %v217, %v216
    %v227 = vpack.c.b16 %v219, %v218
    %236 = vmatpush.bf16.msra.mxu0 %v227
    %237 = vmatpush.bf16.msra.mxu0 %v226
    %238 = vmatpush.bf16.msra.mxu0 %v225
    %239 = vmatpush.bf16.msra.mxu0 %v224
    %240 = vmatpush.bf16.msra.mxu0 %v223
    %241 = vmatpush.bf16.msra.mxu0 %v222
    %242 = vmatpush.bf16.msra.mxu0 %v221
    %243 = vmatpush.bf16.msra.mxu0 %v220
    %244 = vmatmul.bf16.gmra.mxu0 %v167
    %v245 = vpop.f32.mrf.mxu0
    %v246 = vadd.f32 %v186, %v245
    %v247 = vpop.f32.mrf.mxu0
    %248 = vdwg.mxu0
    %v249 = vsub.f32 0.0, %v246
    %v250 = vmul.f32 %v249, 1.442695
    %v251 = vpow.pop %v250
    %v252 = vadd.f32 %v251, 1.0
    %v253 = vrcp.pop %v252
    %v254 = vmin.f32 %v253, 1.0
    %255 = vst [vmem:[#allocation7] sm:$0xff] %v254
    // Predicated region
    $region30: #{tpu_custom_call.1} parent=1 // pred_check
      _
    $region31: #{tpu_custom_call.1} parent=1 // pred_check_branch
      %257 = sbr.rel (0) target = $region33
    $region32: #{tpu_custom_call.1} parent=1 // pred_region
      %259 = vsyncadd [#allocation4], 0
      %s261 = sshll.u32 [#allocation7], 4
      %s262 = int_to_ptr.vmem [resolvable:$true] %s261
      %s263 = sshll.u32 %s5, 4
      %s264 = int_to_ptr.hbm [resolvable:$true] %s263
      %266 = dma.vmem_to_hbm [thread:$0]  %s262, 128, %s264, [#allocation4]
    $region33: #{tpu_custom_call.1} parent=1 // pred_fallthru
      _
    // Predicated region
    $region34: #{tpu_custom_call.1} parent=1 // pred_check
      _
    $region35: #{tpu_custom_call.1} parent=1 // pred_check_branch
      %268 = sbr.rel (0) target = $region37
    $region36: #{tpu_custom_call.1} parent=1 // pred_region
      %270 = dma.done [#allocation4], 128
    $region37: #{tpu_custom_call.1} parent=1 // pred_fallthru
      _
    %271 = vsyncpa [#allocation3], 1
    %272 = vsyncpa [#allocation6], 1
    %273 = vsyncpa [#allocation4], 1

</llo_original>
